<compile_context>
chip_gen: v7x
topology: tpu7x:2x2x1
jax: 0.10.0
libtpu: 0.0.40
codegen_flags: <defaults>
</compile_context>

<pallas_src>
import functools
import math

import jax
import jax.numpy as jnp
from jax.experimental import pallas as pl
from jax.experimental.pallas import tpu as pltpu

KERNEL_SIZE = 3  # Conv1d kernel size used by NextItNet blocks.
_VMEM_LIMIT = 32 * 1024 * 1024  # safe on v5e (128 MiB), v6e (128 MiB), v7x (64 MiB)


def _layernorm(x, g, b, eps=1e-5):
    mu = jnp.mean(x, axis=-1, keepdims=True)
    var = jnp.mean((x - mu) ** 2, axis=-1, keepdims=True)
    return (x - mu) * jax.lax.rsqrt(var + eps) * g + b


def _pick_batch_tile(batch, seq_len, target_rows=1024):
    """Largest divisor of `batch` such that tb*seq_len ~<= target_rows, while keeping
    the grid at >= 2 steps when batch allows (so v7x can shard across both TCs)."""
    cap = max(1, target_rows // max(seq_len, 1))
    if batch >= 2:
        cap = min(cap, batch // 2)          # guarantee >= 2 grid steps for megacore
    cap = max(1, min(cap, batch))
    for t in range(cap, 0, -1):
        if batch % t == 0:
            return t
    # TODO(synk): prime / awkward batch sizes fall back to tb=1 (correct but slow);
    # padding B would be the fix.
    return 1


# ----------------------------------------------------------------------------
# TransformerBlock kernel: one grid step = one batch tile of TB sequences.
# Packed vector rows: 0=bqkv 1=bo 2=b1 3=b2 4=ln1_g 5=ln1_b 6=ln2_g 7=ln2_b
# ----------------------------------------------------------------------------
def _transformer_kernel(x_ref, wqkv_ref, wo_ref, w1_ref, w2_ref, vec_ref,
                        o_ref, *, heads, tb, seq_len):
    L = seq_len
    x3 = x_ref[...].astype(jnp.float32)                   # (TB, L, D)
    D = x3.shape[-1]
    F = w1_ref.shape[1]
    N = tb * L
    dh = D // heads

    vec = vec_ref[...]                                     # (8, VW) f32, one load
    bqkv = vec[0:1, 0:3 * D]
    bo = vec[1:2, 0:D]
    b1 = vec[2:3, 0:F]
    b2 = vec[3:4, 0:D]
    ln1g, ln1b = vec[4:5, 0:D], vec[5:6, 0:D]
    ln2g, ln2b = vec[6:7, 0:D], vec[7:8, 0:D]

    xf = x3.reshape(N, D)                                  # layout-preserving leading merge
    xb = xf.astype(jnp.bfloat16)

    # Fused QKV projection: one bf16 matmul, f32 accumulation.
    # The 1/sqrt(dh) attention scale is already folded into the Q columns of wqkv.
    qkv = jnp.dot(xb, wqkv_ref[...], preferred_element_type=jnp.float32) + bqkv

    head_outs = []
    for h in range(heads):                                 # static, small loop over heads
        qh = qkv[:, h * dh:(h + 1) * dh].reshape(tb, L, dh).astype(jnp.bfloat16)
        kh = qkv[:, D + h * dh:D + (h + 1) * dh].reshape(tb, L, dh).astype(jnp.bfloat16)
        vh = qkv[:, 2 * D + h * dh:2 * D + (h + 1) * dh].reshape(tb, L, dh).astype(jnp.bfloat16)
        # Batched over the batch tile; no explicit transpose materialized.
        s = jnp.einsum('bqd,bkd->bqk', qh, kh, preferred_element_type=jnp.float32)
        s = s - jnp.max(s, axis=-1, keepdims=True)
        p = jnp.exp(s)
        p = p * pl.reciprocal(jnp.sum(p, axis=-1, keepdims=True), approx=True)
        oh = jnp.einsum('bqk,bkd->bqd', p.astype(jnp.bfloat16), vh,
                        preferred_element_type=jnp.float32)
        head_outs.append(oh.reshape(N, dh))
    attn = head_outs[0] if heads == 1 else jnp.concatenate(head_outs, axis=-1)

    attn = jnp.dot(attn.astype(jnp.bfloat16), wo_ref[...],
                   preferred_element_type=jnp.float32) + bo

    y = _layernorm(xf + attn, ln1g, ln1b)

    hdn = jnp.dot(y.astype(jnp.bfloat16), w1_ref[...],
                  preferred_element_type=jnp.float32) + b1
    hdn = jnp.maximum(hdn, 0.0)
    ff = jnp.dot(hdn.astype(jnp.bfloat16), w2_ref[...],
                 preferred_element_type=jnp.float32) + b2

    z = _layernorm(y + ff, ln2g, ln2b)
    o_ref[...] = z.reshape(tb, L, D).astype(o_ref.dtype)


def transformer_block_forward(x, params, heads):
    B, L, D = x.shape
    assert D % heads == 0, f"heads={heads} must divide d_model={D}"
    tb = _pick_batch_tile(B, L)
    F = params["w1"].shape[1]
    weights = (params["wqkv"], params["wo"], params["w1"], params["w2"], params["vecs"])
    w_specs = [pl.BlockSpec(w.shape, lambda i, nd=w.ndim: (0,) * nd) for w in weights]

    flops = 2 * B * L * D * (3 * D + D + 2 * F) + 4 * B * L * L * D
    bytes_accessed = 2 * x.size * x.dtype.itemsize + sum(
        int(w.size) * w.dtype.itemsize for w in weights)
    cost = pl.CostEstimate(flops=int(flops),
                           transcendentals=int(B * heads * L * L),
                           bytes_accessed=int(bytes_accessed))

    return pl.pallas_call(
        functools.partial(_transformer_kernel, heads=heads, tb=tb, seq_len=L),
        out_shape=jax.ShapeDtypeStruct((B, L, D), x.dtype),
        grid=(B // tb,),
        in_specs=[pl.BlockSpec((tb, L, D), lambda i: (i, 0, 0))] + w_specs,
        out_specs=pl.BlockSpec((tb, L, D), lambda i: (i, 0, 0)),
        compiler_params=pltpu.CompilerParams(
            dimension_semantics=("parallel",),
            vmem_limit_bytes=_VMEM_LIMIT),
        cost_estimate=cost,
    )(x, *weights)


# ----------------------------------------------------------------------------
# NextItNet residual block kernel: one grid step = one batch tile of TB sequences.
# Causal dilated Conv1d taps are tile-aligned rolls (XLU) + row masks; the K taps of
# each conv are lane-concatenated so each conv is ONE aligned bf16 MXU matmul
# with K-dim K*D (conv1) / K*F (conv2).
# Packed vector rows: 0=b1 1=b2 2=ln1_g 3=ln1_b 4=ln2_g 5=ln2_b
# ----------------------------------------------------------------------------
def _nextitnet_kernel(x_ref, w1_ref, w2_ref, vec_ref, o_ref, *, dilation, tb, seq_len):
    K = KERNEL_SIZE
    L = seq_len
    D = x_ref.shape[-1]
    F = w1_ref.shape[1]                                    # w1: (K*D, F)
    N = tb * L

    vec = vec_ref[...]                                     # (6, VW) f32, one load
    b1 = vec[0:1, 0:F]
    b2 = vec[1:2, 0:D]
    ln1g, ln1b = vec[2:3, 0:F], vec[3:4, 0:F]
    ln2g, ln2b = vec[4:5, 0:D], vec[5:6, 0:D]

    x = x_ref[...].astype(jnp.float32).reshape(N, D)       # (N, D), leading-dim merge
    # Within-sequence position of each flattened row (sequences are length L).
    pos = jax.lax.broadcasted_iota(jnp.int32, (N, 1), 0) % L

    def causal_taps(v2d, dil):
        # Tap k of a causal dilated conv reads v[t - (K-1-k)*dil]; out-of-range -> 0.
        taps = []
        for k in range(K):
            s = (K - 1 - k) * dil
            if s == 0:
                taps.append(v2d)
            elif s >= L:
                taps.append(jnp.zeros_like(v2d))           # tap reads only left padding
            else:
                vr = pltpu.roll(v2d, shift=s, axis=0)       # sublane roll on the XLU
                taps.append(jnp.where(pos >= s, vr, 0.0))   # zero rows crossing a sequence start
        return jnp.concatenate(taps, axis=-1)               # (N, K*C), lane concat

    # conv1: d_model -> d_layer, kernel K, dilation d (causal), single matmul.
    x_taps = causal_taps(x, dilation).astype(jnp.bfloat16)          # (N, K*D)
    h = jnp.dot(x_taps, w1_ref[...], preferred_element_type=jnp.float32) + b1
    h = jnp.maximum(_layernorm(h, ln1g, ln1b), 0.0)

    # conv2: d_layer -> d_model, kernel K, dilation 2d (causal), single matmul.
    h_taps = causal_taps(h, 2 * dilation).astype(jnp.bfloat16)      # (N, K*F)
    z = jnp.dot(h_taps, w2_ref[...], preferred_element_type=jnp.float32) + b2
    z = jnp.maximum(_layernorm(z, ln2g, ln2b), 0.0)

    o_ref[...] = (x + z).reshape(tb, L, D).astype(o_ref.dtype)


def nextitnet_forward(x, params, dilation):
    B, L, D = x.shape
    tb = _pick_batch_tile(B, L)
    F = params["w1"].shape[1]
    weights = (params["w1"], params["w2"], params["vecs"])
    w_specs = [pl.BlockSpec(w.shape, lambda i, nd=w.ndim: (0,) * nd) for w in weights]

    flops = 4 * B * L * KERNEL_SIZE * D * F
    bytes_accessed = 2 * x.size * x.dtype.itemsize + sum(
        int(w.size) * w.dtype.itemsize for w in weights)
    cost = pl.CostEstimate(flops=int(flops), transcendentals=0,
                           bytes_accessed=int(bytes_accessed))

    return pl.pallas_call(
        functools.partial(_nextitnet_kernel, dilation=dilation, tb=tb, seq_len=L),
        out_shape=jax.ShapeDtypeStruct((B, L, D), x.dtype),
        grid=(B // tb,),
        in_specs=[pl.BlockSpec((tb, L, D), lambda i: (i, 0, 0))] + w_specs,
        out_specs=pl.BlockSpec((tb, L, D), lambda i: (i, 0, 0)),
        compiler_params=pltpu.CompilerParams(
            dimension_semantics=("parallel",),
            vmem_limit_bytes=_VMEM_LIMIT),
        cost_estimate=cost,
    )(x, *weights)


# ----------------------------------------------------------------------------
# Parameter construction (deterministic, in-script).  Matmul weights are stored
# in bf16 (MXU operands); biases / LayerNorm vectors are packed into one f32 array.
# ----------------------------------------------------------------------------
def _init_transformer_params(key, d_model, d_layer, heads):
    ks = jax.random.split(key, 4)
    s = 0.02
    dh = d_model // heads
    wqkv = s * jax.random.normal(ks[0], (d_model, 3 * d_model), jnp.float32)
    # Fold the 1/sqrt(dh) attention scale into the Q columns (free at runtime).
    # (A nonzero Q bias would need the same pre-scaling; biases here are zero.)
    wqkv = wqkv.at[:, :d_model].multiply(1.0 / math.sqrt(dh))

    vw = max(3 * d_model, d_layer)
    vecs = jnp.zeros((8, vw), jnp.float32)
    vecs = vecs.at[4, :d_model].set(1.0)   # ln1_g
    vecs = vecs.at[6, :d_model].set(1.0)   # ln2_g
    return {
        "wqkv": wqkv.astype(jnp.bfloat16),
        "wo": (s * jax.random.normal(ks[1], (d_model, d_model), jnp.float32)).astype(jnp.bfloat16),
        "w1": (s * jax.random.normal(ks[2], (d_model, d_layer), jnp.float32)).astype(jnp.bfloat16),
        "w2": (s * jax.random.normal(ks[3], (d_layer, d_model), jnp.float32)).astype(jnp.bfloat16),
        "vecs": vecs,
    }


def _init_nextitnet_params(key, d_model, d_layer):
    ks = jax.random.split(key, 2)
    s = 0.05
    w1 = s * jax.random.normal(ks[0], (KERNEL_SIZE, d_model, d_layer), jnp.float32)
    w2 = s * jax.random.normal(ks[1], (KERNEL_SIZE, d_layer, d_model), jnp.float32)
    vw = max(d_model, d_layer)
    vecs = jnp.zeros((6, vw), jnp.float32)
    vecs = vecs.at[2, :d_layer].set(1.0)   # ln1_g
    vecs = vecs.at[4, :d_model].set(1.0)   # ln2_g
    return {
        # Pre-reshape so each conv is a single (K*C_in, C_out) matmul in-kernel.
        "w1": w1.reshape(KERNEL_SIZE * d_model, d_layer).astype(jnp.bfloat16),
        "w2": w2.reshape(KERNEL_SIZE * d_layer, d_model).astype(jnp.bfloat16),
        "vecs": vecs,
    }


def build_mixop(key, d_model, setting):
    """Mirror MixOp.__init__ op ordering; returns a list of (kind, hp, params)."""
    attn_heads, dilations, d_layers = setting
    ops = []
    i = 0
    for head in attn_heads:
        for d_layer in d_layers:
            ops.append(("transformer", head,
                        _init_transformer_params(jax.random.fold_in(key, i),
                                                 d_model, d_layer, head)))
            i += 1
    for dilation in dilations:
        for d_layer in d_layers:
            ops.append(("nextitnet", dilation,
                        _init_nextitnet_params(jax.random.fold_in(key, i),
                                               d_model, d_layer)))
            i += 1
    return ops


def mixop_forward(x, index, ops):
    """MixOp.forward(x, index): dispatch to the index-th candidate op.
    `index` is a Python int (same as PyTorch ModuleList indexing)."""
    kind, hp, params = ops[index]
    if kind == "transformer":
        return transformer_block_forward(x, params, heads=hp)
    return nextitnet_forward(x, params, dilation=hp)


if __name__ == "__main__":
    key = jax.random.PRNGKey(0)
    B, L, d_model = 2, 8, 32
    # setting = (attn_heads, dilations, d_layer)
    setting = ([1, 2], [1, 2], [16])
    ops = build_mixop(key, d_model, setting)   # 2 transformer + 2 nextitnet candidates

    x = jax.random.normal(jax.random.fold_in(key, 1234), (B, L, d_model), jnp.float32)

    y_attn = mixop_forward(x, 1, ops)   # TransformerBlock(d_layer=16, d_model=32, heads=2)
    y_conv = mixop_forward(x, 3, ops)   # NextItNet(d_layer=16, d_model=32, dilation=2)
    jax.block_until_ready((y_attn, y_conv))

    assert y_attn.shape == (B, L, d_model) and y_conv.shape == (B, L, d_model)
    assert bool(jnp.all(jnp.isfinite(y_attn))) and bool(jnp.all(jnp.isfinite(y_conv)))
    print("KERNEL_OK")
</pallas_src>

<mosaic_0001>
module attributes {stable_mosaic.version = 11 : i64} {
  func.func @_transformer_kernel(%arg0: i32, %arg1: memref<1x8x32xf32, #tpu.memory_space<vmem>>, %arg2: memref<32x96xbf16, #tpu.memory_space<vmem>>, %arg3: memref<32x32xbf16, #tpu.memory_space<vmem>>, %arg4: memref<32x16xbf16, #tpu.memory_space<vmem>>, %arg5: memref<16x32xbf16, #tpu.memory_space<vmem>>, %arg6: memref<8x96xf32, #tpu.memory_space<vmem>>, %arg7: memref<1x8x32xf32, #tpu.memory_space<vmem>>) attributes {dimension_semantics = [#tpu.dimension_semantics<parallel>], iteration_bounds = array<i64: 2>, scalar_prefetch = 0 : i64, scratch_operands = 0 : i64, tpu.core_type = #tpu.core_type<tc>, window_params = [{transform_indices = @transform_0, window_bounds = array<i64: 1, 8, 32>}, {pipeline_mode = #tpu.pipeline_mode<synchronous>, transform_indices = @transform_1, window_bounds = array<i64: 32, 96>}, {pipeline_mode = #tpu.pipeline_mode<synchronous>, transform_indices = @transform_2, window_bounds = array<i64: 32, 32>}, {pipeline_mode = #tpu.pipeline_mode<synchronous>, transform_indices = @transform_3, window_bounds = array<i64: 32, 16>}, {pipeline_mode = #tpu.pipeline_mode<synchronous>, transform_indices = @transform_4, window_bounds = array<i64: 16, 32>}, {pipeline_mode = #tpu.pipeline_mode<synchronous>, transform_indices = @transform_5, window_bounds = array<i64: 8, 96>}, {transform_indices = @transform_6, window_bounds = array<i64: 1, 8, 32>}]} {
    %c0 = arith.constant 0 : index
    %c0_0 = arith.constant 0 : index
    %c0_1 = arith.constant 0 : index
    %0 = vector.load %arg1[%c0, %c0_0, %c0_1] : memref<1x8x32xf32, #tpu.memory_space<vmem>>, vector<1x8x32xf32>
    %c0_2 = arith.constant 0 : index
    %c0_3 = arith.constant 0 : index
    %1 = vector.load %arg6[%c0_2, %c0_3] : memref<8x96xf32, #tpu.memory_space<vmem>>, vector<8x96xf32>
    %2 = vector.extract_strided_slice %1 {offsets = [0, 0], sizes = [1, 96], strides = [1, 1]} : vector<8x96xf32> to vector<1x96xf32>
    %3 = vector.extract_strided_slice %1 {offsets = [1, 0], sizes = [1, 32], strides = [1, 1]} : vector<8x96xf32> to vector<1x32xf32>
    %4 = vector.extract_strided_slice %1 {offsets = [2, 0], sizes = [1, 16], strides = [1, 1]} : vector<8x96xf32> to vector<1x16xf32>
    %5 = vector.extract_strided_slice %1 {offsets = [3, 0], sizes = [1, 32], strides = [1, 1]} : vector<8x96xf32> to vector<1x32xf32>
    %6 = vector.extract_strided_slice %1 {offsets = [4, 0], sizes = [1, 32], strides = [1, 1]} : vector<8x96xf32> to vector<1x32xf32>
    %7 = vector.extract_strided_slice %1 {offsets = [5, 0], sizes = [1, 32], strides = [1, 1]} : vector<8x96xf32> to vector<1x32xf32>
    %8 = vector.extract_strided_slice %1 {offsets = [6, 0], sizes = [1, 32], strides = [1, 1]} : vector<8x96xf32> to vector<1x32xf32>
    %9 = vector.extract_strided_slice %1 {offsets = [7, 0], sizes = [1, 32], strides = [1, 1]} : vector<8x96xf32> to vector<1x32xf32>
    %10 = vector.shape_cast %0 : vector<1x8x32xf32> to vector<8x32xf32>
    %11 = arith.truncf %10 : vector<8x32xf32> to vector<8x32xbf16>
    %c0_4 = arith.constant 0 : index
    %c0_5 = arith.constant 0 : index
    %12 = vector.load %arg2[%c0_4, %c0_5] : memref<32x96xbf16, #tpu.memory_space<vmem>>, vector<32x96xbf16>
    %cst = arith.constant dense<0.000000e+00> : vector<8x96xf32>
    %13 = tpu.matmul %11, %12, %cst {dimension_numbers = #tpu.dot_dimension_numbers<[1], [0], [0], [1], [0, 0, 1, 1], [], []>} : vector<8x32xbf16>, vector<32x96xbf16>, vector<8x96xf32> -> vector<8x96xf32>
    %14 = vector.broadcast %2 : vector<1x96xf32> to vector<8x96xf32>
    %15 = arith.addf %13, %14 : vector<8x96xf32>
    %16 = vector.extract_strided_slice %15 {offsets = [0, 0], sizes = [8, 16], strides = [1, 1]} : vector<8x96xf32> to vector<8x16xf32>
    %17 = vector.shape_cast %16 : vector<8x16xf32> to vector<1x8x16xf32>
    %18 = arith.truncf %17 : vector<1x8x16xf32> to vector<1x8x16xbf16>
    %19 = vector.extract_strided_slice %15 {offsets = [0, 32], sizes = [8, 16], strides = [1, 1]} : vector<8x96xf32> to vector<8x16xf32>
    %20 = vector.shape_cast %19 : vector<8x16xf32> to vector<1x8x16xf32>
    %21 = arith.truncf %20 : vector<1x8x16xf32> to vector<1x8x16xbf16>
    %22 = vector.extract_strided_slice %15 {offsets = [0, 64], sizes = [8, 16], strides = [1, 1]} : vector<8x96xf32> to vector<8x16xf32>
    %23 = vector.shape_cast %22 : vector<8x16xf32> to vector<1x8x16xf32>
    %24 = arith.truncf %23 : vector<1x8x16xf32> to vector<1x8x16xbf16>
    "tpu.trace_start"() <{level = 10 : i32, message = "bqd,bkd->bqk"}> : () -> ()
    %cst_6 = arith.constant dense<0.000000e+00> : vector<1x8x8xf32>
    %25 = tpu.matmul %18, %21, %cst_6 {dimension_numbers = #tpu.dot_dimension_numbers<[2], [2], [1], [1], [0, 0, 0, 1, 1, 1], [0], [0]>} : vector<1x8x16xbf16>, vector<1x8x16xbf16>, vector<1x8x8xf32> -> vector<1x8x8xf32>
    "tpu.trace_stop"() : () -> ()
    %cst_7 = arith.constant dense<0xFF800000> : vector<1x8xf32>
    %26 = vector.multi_reduction <maximumf>, %25, %cst_7 [2] : vector<1x8x8xf32> to vector<1x8xf32>
    %27 = vector.shape_cast %26 : vector<1x8xf32> to vector<1x8x1xf32>
    %28 = vector.broadcast %27 : vector<1x8x1xf32> to vector<1x8x8xf32>
    %29 = arith.subf %25, %28 : vector<1x8x8xf32>
    %30 = math.exp %29 : vector<1x8x8xf32>
    %cst_8 = arith.constant dense<0.000000e+00> : vector<1x8xf32>
    %31 = vector.multi_reduction <add>, %30, %cst_8 [2] : vector<1x8x8xf32> to vector<1x8xf32>
    %32 = vector.shape_cast %31 : vector<1x8xf32> to vector<1x8x1xf32>
    %33 = tpu.reciprocal %32 {approx = true} : vector<1x8x1xf32> -> vector<1x8x1xf32>
    %34 = vector.broadcast %33 : vector<1x8x1xf32> to vector<1x8x8xf32>
    %35 = arith.mulf %30, %34 : vector<1x8x8xf32>
    %36 = arith.truncf %35 : vector<1x8x8xf32> to vector<1x8x8xbf16>
    "tpu.trace_start"() <{level = 10 : i32, message = "bqk,bkd->bqd"}> : () -> ()
    %cst_9 = arith.constant dense<0.000000e+00> : vector<1x8x16xf32>
    %37 = tpu.matmul %36, %24, %cst_9 {dimension_numbers = #tpu.dot_dimension_numbers<[2], [1], [1], [2], [0, 0, 0, 1, 1, 2], [0], [0]>} : vector<1x8x8xbf16>, vector<1x8x16xbf16>, vector<1x8x16xf32> -> vector<1x8x16xf32>
    "tpu.trace_stop"() : () -> ()
    %38 = vector.shape_cast %37 : vector<1x8x16xf32> to vector<8x16xf32>
    %39 = vector.extract_strided_slice %15 {offsets = [0, 16], sizes = [8, 16], strides = [1, 1]} : vector<8x96xf32> to vector<8x16xf32>
    %40 = vector.shape_cast %39 : vector<8x16xf32> to vector<1x8x16xf32>
    %41 = arith.truncf %40 : vector<1x8x16xf32> to vector<1x8x16xbf16>
    %42 = vector.extract_strided_slice %15 {offsets = [0, 48], sizes = [8, 16], strides = [1, 1]} : vector<8x96xf32> to vector<8x16xf32>
    %43 = vector.shape_cast %42 : vector<8x16xf32> to vector<1x8x16xf32>
    %44 = arith.truncf %43 : vector<1x8x16xf32> to vector<1x8x16xbf16>
    %45 = vector.extract_strided_slice %15 {offsets = [0, 80], sizes = [8, 16], strides = [1, 1]} : vector<8x96xf32> to vector<8x16xf32>
    %46 = vector.shape_cast %45 : vector<8x16xf32> to vector<1x8x16xf32>
    %47 = arith.truncf %46 : vector<1x8x16xf32> to vector<1x8x16xbf16>
    "tpu.trace_start"() <{level = 10 : i32, message = "bqd,bkd->bqk"}> : () -> ()
    %cst_10 = arith.constant dense<0.000000e+00> : vector<1x8x8xf32>
    %48 = tpu.matmul %41, %44, %cst_10 {dimension_numbers = #tpu.dot_dimension_numbers<[2], [2], [1], [1], [0, 0, 0, 1, 1, 1], [0], [0]>} : vector<1x8x16xbf16>, vector<1x8x16xbf16>, vector<1x8x8xf32> -> vector<1x8x8xf32>
    "tpu.trace_stop"() : () -> ()
    %cst_11 = arith.constant dense<0xFF800000> : vector<1x8xf32>
    %49 = vector.multi_reduction <maximumf>, %48, %cst_11 [2] : vector<1x8x8xf32> to vector<1x8xf32>
    %50 = vector.shape_cast %49 : vector<1x8xf32> to vector<1x8x1xf32>
    %51 = vector.broadcast %50 : vector<1x8x1xf32> to vector<1x8x8xf32>
    %52 = arith.subf %48, %51 : vector<1x8x8xf32>
    %53 = math.exp %52 : vector<1x8x8xf32>
    %cst_12 = arith.constant dense<0.000000e+00> : vector<1x8xf32>
    %54 = vector.multi_reduction <add>, %53, %cst_12 [2] : vector<1x8x8xf32> to vector<1x8xf32>
    %55 = vector.shape_cast %54 : vector<1x8xf32> to vector<1x8x1xf32>
    %56 = tpu.reciprocal %55 {approx = true} : vector<1x8x1xf32> -> vector<1x8x1xf32>
    %57 = vector.broadcast %56 : vector<1x8x1xf32> to vector<1x8x8xf32>
    %58 = arith.mulf %53, %57 : vector<1x8x8xf32>
    %59 = arith.truncf %58 : vector<1x8x8xf32> to vector<1x8x8xbf16>
    "tpu.trace_start"() <{level = 10 : i32, message = "bqk,bkd->bqd"}> : () -> ()
    %cst_13 = arith.constant dense<0.000000e+00> : vector<1x8x16xf32>
    %60 = tpu.matmul %59, %47, %cst_13 {dimension_numbers = #tpu.dot_dimension_numbers<[2], [1], [1], [2], [0, 0, 0, 1, 1, 2], [0], [0]>} : vector<1x8x8xbf16>, vector<1x8x16xbf16>, vector<1x8x16xf32> -> vector<1x8x16xf32>
    "tpu.trace_stop"() : () -> ()
    %61 = vector.shape_cast %60 : vector<1x8x16xf32> to vector<8x16xf32>
    %62 = tpu.concatenate %38, %61 in 1 : vector<8x16xf32>, vector<8x16xf32> -> vector<8x32xf32>
    %63 = arith.truncf %62 : vector<8x32xf32> to vector<8x32xbf16>
    %c0_14 = arith.constant 0 : index
    %c0_15 = arith.constant 0 : index
    %64 = vector.load %arg3[%c0_14, %c0_15] : memref<32x32xbf16, #tpu.memory_space<vmem>>, vector<32x32xbf16>
    %cst_16 = arith.constant dense<0.000000e+00> : vector<8x32xf32>
    %65 = tpu.matmul %63, %64, %cst_16 {dimension_numbers = #tpu.dot_dimension_numbers<[1], [0], [0], [1], [0, 0, 1, 1], [], []>} : vector<8x32xbf16>, vector<32x32xbf16>, vector<8x32xf32> -> vector<8x32xf32>
    %66 = vector.broadcast %3 : vector<1x32xf32> to vector<8x32xf32>
    %67 = arith.addf %65, %66 : vector<8x32xf32>
    %68 = arith.addf %10, %67 : vector<8x32xf32>
    %cst_17 = arith.constant dense<0.000000e+00> : vector<8xf32>
    %69 = vector.multi_reduction <add>, %68, %cst_17 [1] : vector<8x32xf32> to vector<8xf32>
    %70 = vector.shape_cast %69 : vector<8xf32> to vector<8x1xf32>
    %cst_18 = arith.constant 3.200000e+01 : f32
    %71 = vector.broadcast %cst_18 : f32 to vector<8x1xf32>
    %72 = arith.divf %70, %71 : vector<8x1xf32>
    %73 = vector.broadcast %72 : vector<8x1xf32> to vector<8x32xf32>
    %74 = arith.subf %68, %73 : vector<8x32xf32>
    %75 = arith.mulf %74, %74 : vector<8x32xf32>
    %cst_19 = arith.constant dense<0.000000e+00> : vector<8xf32>
    %76 = vector.multi_reduction <add>, %75, %cst_19 [1] : vector<8x32xf32> to vector<8xf32>
    %77 = vector.shape_cast %76 : vector<8xf32> to vector<8x1xf32>
    %cst_20 = arith.constant 3.200000e+01 : f32
    %78 = vector.broadcast %cst_20 : f32 to vector<8x1xf32>
    %79 = arith.divf %77, %78 : vector<8x1xf32>
    %80 = vector.broadcast %72 : vector<8x1xf32> to vector<8x32xf32>
    %81 = arith.subf %68, %80 : vector<8x32xf32>
    %cst_21 = arith.constant 9.99999974E-6 : f32
    %82 = vector.broadcast %cst_21 : f32 to vector<8x1xf32>
    %83 = arith.addf %79, %82 : vector<8x1xf32>
    %84 = math.rsqrt %83 : vector<8x1xf32>
    %85 = vector.broadcast %84 : vector<8x1xf32> to vector<8x32xf32>
    %86 = arith.mulf %81, %85 : vector<8x32xf32>
    %87 = vector.broadcast %6 : vector<1x32xf32> to vector<8x32xf32>
    %88 = arith.mulf %86, %87 : vector<8x32xf32>
    %89 = vector.broadcast %7 : vector<1x32xf32> to vector<8x32xf32>
    %90 = arith.addf %88, %89 : vector<8x32xf32>
    %91 = arith.truncf %90 : vector<8x32xf32> to vector<8x32xbf16>
    %c0_22 = arith.constant 0 : index
    %c0_23 = arith.constant 0 : index
    %92 = vector.load %arg4[%c0_22, %c0_23] : memref<32x16xbf16, #tpu.memory_space<vmem>>, vector<32x16xbf16>
    %cst_24 = arith.constant dense<0.000000e+00> : vector<8x16xf32>
    %93 = tpu.matmul %91, %92, %cst_24 {dimension_numbers = #tpu.dot_dimension_numbers<[1], [0], [0], [1], [0, 0, 1, 1], [], []>} : vector<8x32xbf16>, vector<32x16xbf16>, vector<8x16xf32> -> vector<8x16xf32>
    %94 = vector.broadcast %4 : vector<1x16xf32> to vector<8x16xf32>
    %95 = arith.addf %93, %94 : vector<8x16xf32>
    %cst_25 = arith.constant 0.000000e+00 : f32
    %96 = vector.broadcast %cst_25 : f32 to vector<8x16xf32>
    %97 = arith.maximumf %95, %96 : vector<8x16xf32>
    %98 = arith.truncf %97 : vector<8x16xf32> to vector<8x16xbf16>
    %c0_26 = arith.constant 0 : index
    %c0_27 = arith.constant 0 : index
    %99 = vector.load %arg5[%c0_26, %c0_27] : memref<16x32xbf16, #tpu.memory_space<vmem>>, vector<16x32xbf16>
    %cst_28 = arith.constant dense<0.000000e+00> : vector<8x32xf32>
    %100 = tpu.matmul %98, %99, %cst_28 {dimension_numbers = #tpu.dot_dimension_numbers<[1], [0], [0], [1], [0, 0, 1, 1], [], []>} : vector<8x16xbf16>, vector<16x32xbf16>, vector<8x32xf32> -> vector<8x32xf32>
    %101 = vector.broadcast %5 : vector<1x32xf32> to vector<8x32xf32>
    %102 = arith.addf %100, %101 : vector<8x32xf32>
    %103 = arith.addf %90, %102 : vector<8x32xf32>
    %cst_29 = arith.constant dense<0.000000e+00> : vector<8xf32>
    %104 = vector.multi_reduction <add>, %103, %cst_29 [1] : vector<8x32xf32> to vector<8xf32>
    %105 = vector.shape_cast %104 : vector<8xf32> to vector<8x1xf32>
    %cst_30 = arith.constant 3.200000e+01 : f32
    %106 = vector.broadcast %cst_30 : f32 to vector<8x1xf32>
    %107 = arith.divf %105, %106 : vector<8x1xf32>
    %108 = vector.broadcast %107 : vector<8x1xf32> to vector<8x32xf32>
    %109 = arith.subf %103, %108 : vector<8x32xf32>
    %110 = arith.mulf %109, %109 : vector<8x32xf32>
    %cst_31 = arith.constant dense<0.000000e+00> : vector<8xf32>
    %111 = vector.multi_reduction <add>, %110, %cst_31 [1] : vector<8x32xf32> to vector<8xf32>
    %112 = vector.shape_cast %111 : vector<8xf32> to vector<8x1xf32>
    %cst_32 = arith.constant 3.200000e+01 : f32
    %113 = vector.broadcast %cst_32 : f32 to vector<8x1xf32>
    %114 = arith.divf %112, %113 : vector<8x1xf32>
    %115 = vector.broadcast %107 : vector<8x1xf32> to vector<8x32xf32>
    %116 = arith.subf %103, %115 : vector<8x32xf32>
    %cst_33 = arith.constant 9.99999974E-6 : f32
    %117 = vector.broadcast %cst_33 : f32 to vector<8x1xf32>
    %118 = arith.addf %114, %117 : vector<8x1xf32>
    %119 = math.rsqrt %118 : vector<8x1xf32>
    %120 = vector.broadcast %119 : vector<8x1xf32> to vector<8x32xf32>
    %121 = arith.mulf %116, %120 : vector<8x32xf32>
    %122 = vector.broadcast %8 : vector<1x32xf32> to vector<8x32xf32>
    %123 = arith.mulf %121, %122 : vector<8x32xf32>
    %124 = vector.broadcast %9 : vector<1x32xf32> to vector<8x32xf32>
    %125 = arith.addf %123, %124 : vector<8x32xf32>
    %126 = vector.shape_cast %125 : vector<8x32xf32> to vector<1x8x32xf32>
    %c0_34 = arith.constant 0 : index
    %c0_35 = arith.constant 0 : index
    %c0_36 = arith.constant 0 : index
    %127 = vector.load %arg7[%c0_34, %c0_35, %c0_36] : memref<1x8x32xf32, #tpu.memory_space<vmem>>, vector<1x8x32xf32>
    tpu.vector_store %arg7[%c0_34, %c0_35, %c0_36], %126 {strides = array<i32>} : memref<1x8x32xf32, #tpu.memory_space<vmem>>, vector<1x8x32xf32>,
    return
  }
  func.func @transform_0(%arg0: i32) -> (i32, i32, i32) {
    %c0_i32 = arith.constant 0 : i32
    %c0_i32_0 = arith.constant 0 : i32
    %c0_i32_1 = arith.constant 0 : i32
    return %arg0, %c0_i32, %c0_i32_0 : i32, i32, i32
  }
  func.func @transform_1(%arg0: i32) -> (i32, i32) {
    %c0_i32 = arith.constant 0 : i32
    %c0_i32_0 = arith.constant 0 : i32
    %c0_i32_1 = arith.constant 0 : i32
    return %c0_i32, %c0_i32_0 : i32, i32
  }
  func.func @transform_2(%arg0: i32) -> (i32, i32) {
    %c0_i32 = arith.constant 0 : i32
    %c0_i32_0 = arith.constant 0 : i32
    %c0_i32_1 = arith.constant 0 : i32
    return %c0_i32, %c0_i32_0 : i32, i32
  }
  func.func @transform_3(%arg0: i32) -> (i32, i32) {
    %c0_i32 = arith.constant 0 : i32
    %c0_i32_0 = arith.constant 0 : i32
    %c0_i32_1 = arith.constant 0 : i32
    return %c0_i32, %c0_i32_0 : i32, i32
  }
  func.func @transform_4(%arg0: i32) -> (i32, i32) {
    %c0_i32 = arith.constant 0 : i32
    %c0_i32_0 = arith.constant 0 : i32
    %c0_i32_1 = arith.constant 0 : i32
    return %c0_i32, %c0_i32_0 : i32, i32
  }
  func.func @transform_5(%arg0: i32) -> (i32, i32) {
    %c0_i32 = arith.constant 0 : i32
    %c0_i32_0 = arith.constant 0 : i32
    %c0_i32_1 = arith.constant 0 : i32
    return %c0_i32, %c0_i32_0 : i32, i32
  }
  func.func @transform_6(%arg0: i32) -> (i32, i32, i32) {
    %c0_i32 = arith.constant 0 : i32
    %c0_i32_0 = arith.constant 0 : i32
    %c0_i32_1 = arith.constant 0 : i32
    return %arg0, %c0_i32, %c0_i32_0 : i32, i32, i32
  }
}

</mosaic_0001>

<llo_original>
// kernel: tpu_custom_call.1
$region0: #{tpu_custom_call.1}
  #allocation0 [shape = 'u32[]', space=smem, size = 0x4, offset = 0x4, fixed_abs, tag = 'smem constant byte address 0x4 - core index']
  #allocation1 [shape = 'u32[144,128]{1,0:T(1,128)}', space=vmem, size = 0x12000, scoped, tag = 'internal scratch']
  %s0 = inlined_call_operand.vmem [shape: f32[2,8,32], index: 0, kind: input, shape index: {}]
  %s1 = inlined_call_operand.hbm [shape: bf16[32,96], index: 1, kind: input, shape index: {}]
  %s2 = inlined_call_operand.hbm [shape: bf16[32,32], index: 2, kind: input, shape index: {}]
  %s3 = inlined_call_operand.vmem [shape: bf16[32,16], index: 3, kind: input, shape index: {}]
  %s4 = inlined_call_operand.vmem [shape: bf16[16,32], index: 4, kind: input, shape index: {}]
  %s5 = inlined_call_operand.vmem [shape: f32[8,96], index: 5, kind: input, shape index: {}]
  %s6 = inlined_call_operand.hbm [shape: f32[2,8,32], index: 6, kind: output, shape index: {}]
  %s7 = sld [smem:[#allocation0]]
  $region65: #{tpu_custom_call.1} parent=0
    _
  %s9 = ssub.s32 1, %s7
  %s10 = scalar_select 0, %s9, %s7
  $region1: #{tpu_custom_call.1} parent=0
    #allocation2 [shape = 'u8[8192]{0}', space=vmem, size = 0x2000, scoped, tag = 'input window, operand 1, single buffered']
    #allocation3 [shape = 's32[2]{0}', space=sflag, size = 0x8, scoped, tag = 'scoped memory for tpu_custom_call.1']
    #allocation4 [shape = 's32[2]{0}', space=sflag, size = 0x8, scoped, tag = 'scoped memory for tpu_custom_call.1']
    #allocation5 [shape = 'u8[8192]{0}', space=vmem, size = 0x2000, scoped, tag = 'input window, operand 2, single buffered']
    #allocation6 [shape = 's32[1]{0}', space=sflag, size = 0x4, scoped, tag = 'scoped memory for tpu_custom_call.1']
    #allocation7 [shape = 'u8[8192]{0}', space=vmem, size = 0x2000, scoped, tag = 'output window, operand 0']
    %11 = vsyncpa [#allocation3], 0
    %12 = vsyncpa [#allocation6], 0
    %13 = vsyncpa [#allocation4], 0
    %s14 = scalar_lea.sflag [#allocation4], 1
    %15 = vsyncpa %s14, 0
    loop: start=0, step=1, limit=4
    $region2: #{tpu_custom_call.1} parent=1 // loop_pre_header
      _
    $region3: #{tpu_custom_call.1} parent=1 // loop_header
      %s17 = sphi 0, %s21
      %p18 = scmp.ge.s32.totalorder %s17, 4
      %s27 = sphi 0, %s29
      %s30 = sphi 0, %s27
      %s31 = sphi 0, %s30
      %s47 = sphi 0, %s31
      %s51 = sphi 0, %s51
      %s53 = sphi 0, %s51
      %s54 = sphi 0, %s53
      %s68 = sphi 0, %s54
      %s72 = sphi 0, %s72
      %s74 = sphi 0, %s72
      %s75 = sphi 0, %s74
      %s89 = sphi 0, %s75
      %s93 = sphi 0, %s93
      %s95 = sphi 0, %s93
      %s96 = sphi 0, %s95
      %s110 = sphi 0, %s96
      %s114 = sphi 0, %s114
      %s116 = sphi 0, %s114
      %s117 = sphi 0, %s116
      %s131 = sphi 0, %s117
      %s135 = sphi 0, %s135
      %s137 = sphi 0, %s135
      %s138 = sphi 0, %s137
      %s152 = sphi 0, %s138
      %s158 = sphi 0, %s160
      %s161 = sphi 0, %s158
      %s162 = sphi 0, %s161
      %s178 = sphi 0, %s162
    $region4: #{tpu_custom_call.1} parent=1 // loop_header_branch
      %20 = sbr.rel (%p18) target = $region8
    $region5: #{tpu_custom_call.1} parent=1 // loop_body
      %s22 = ssub.s32 %s17, 1
      %s23 = ssub.s32 %s17, 2
      %s24 = sadd.s32 %s17, 1
      %s25 = ssub.s32 %s17, %s24
      %p26 = scmp.eq.s32.totalorder %s25, 0
      %s28 = sadd.s32 %s27, 1
      %s29 = scalar_select %p26, %s27, %s28
      %p32 = pneg %p26
      %p33 = scmp.eq.s32.totalorder %s17, 1
      %p34 = por %p32, %p33
      %p35 = scmp.ne.s32.totalorder %s27, %s30
      %p36 = scmp.eq.s32.totalorder %s17, 0
      %p37 = por %p35, %p36
      %p38 = scmp.ne.s32.totalorder %s27, %s30
      %p39 = scmp.eq.s32.totalorder %s22, 1
      %p40 = por %p38, %p39
      %p41 = scmp.ne.s32.totalorder %s30, %s31
      %p42 = scmp.eq.s32.totalorder %s22, 0
      %p43 = por %p41, %p42
      %p44 = scmp.ne.s32.totalorder %s30, %s31
      %p45 = scmp.eq.s32.totalorder %s23, 1
      %p46 = por %p44, %p45
      %p48 = scmp.ne.s32.totalorder %s31, %s47
      %p49 = scmp.eq.s32.totalorder %s23, 0
      %p50 = por %p48, %p49
      %s52 = sadd.s32 %s51, 1
      %p55 = scmp.eq.s32.totalorder %s17, 1
      %p56 = scmp.ne.s32.totalorder %s51, %s53
      %p57 = scmp.eq.s32.totalorder %s17, 0
      %p58 = por %p56, %p57
      %p59 = scmp.ne.s32.totalorder %s51, %s53
      %p60 = scmp.eq.s32.totalorder %s22, 1
      %p61 = por %p59, %p60
      %p62 = scmp.ne.s32.totalorder %s53, %s54
      %p63 = scmp.eq.s32.totalorder %s22, 0
      %p64 = por %p62, %p63
      %p65 = scmp.ne.s32.totalorder %s53, %s54
      %p66 = scmp.eq.s32.totalorder %s23, 1
      %p67 = por %p65, %p66
      %p69 = scmp.ne.s32.totalorder %s54, %s68
      %p70 = scmp.eq.s32.totalorder %s23, 0
      %p71 = por %p69, %p70
      %s73 = sadd.s32 %s72, 1
      %p76 = scmp.eq.s32.totalorder %s17, 1
      %p77 = scmp.ne.s32.totalorder %s72, %s74
      %p78 = scmp.eq.s32.totalorder %s17, 0
      %p79 = por %p77, %p78
      %p80 = scmp.ne.s32.totalorder %s72, %s74
      %p81 = scmp.eq.s32.totalorder %s22, 1
      %p82 = por %p80, %p81
      %p83 = scmp.ne.s32.totalorder %s74, %s75
      %p84 = scmp.eq.s32.totalorder %s22, 0
      %p85 = por %p83, %p84
      %p86 = scmp.ne.s32.totalorder %s74, %s75
      %p87 = scmp.eq.s32.totalorder %s23, 1
      %p88 = por %p86, %p87
      %p90 = scmp.ne.s32.totalorder %s75, %s89
      %p91 = scmp.eq.s32.totalorder %s23, 0
      %p92 = por %p90, %p91
      %s94 = sadd.s32 %s93, 1
      %p97 = scmp.eq.s32.totalorder %s17, 1
      %p98 = scmp.ne.s32.totalorder %s93, %s95
      %p99 = scmp.eq.s32.totalorder %s17, 0
      %p100 = por %p98, %p99
      %p101 = scmp.ne.s32.totalorder %s93, %s95
      %p102 = scmp.eq.s32.totalorder %s22, 1
      %p103 = por %p101, %p102
      %p104 = scmp.ne.s32.totalorder %s95, %s96
      %p105 = scmp.eq.s32.totalorder %s22, 0
      %p106 = por %p104, %p105
      %p107 = scmp.ne.s32.totalorder %s95, %s96
      %p108 = scmp.eq.s32.totalorder %s23, 1
      %p109 = por %p107, %p108
      %p111 = scmp.ne.s32.totalorder %s96, %s110
      %p112 = scmp.eq.s32.totalorder %s23, 0
      %p113 = por %p111, %p112
      %s115 = sadd.s32 %s114, 1
      %p118 = scmp.eq.s32.totalorder %s17, 1
      %p119 = scmp.ne.s32.totalorder %s114, %s116
      %p120 = scmp.eq.s32.totalorder %s17, 0
      %p121 = por %p119, %p120
      %p122 = scmp.ne.s32.totalorder %s114, %s116
      %p123 = scmp.eq.s32.totalorder %s22, 1
      %p124 = por %p122, %p123
      %p125 = scmp.ne.s32.totalorder %s116, %s117
      %p126 = scmp.eq.s32.totalorder %s22, 0
      %p127 = por %p125, %p126
      %p128 = scmp.ne.s32.totalorder %s116, %s117
      %p129 = scmp.eq.s32.totalorder %s23, 1
      %p130 = por %p128, %p129
      %p132 = scmp.ne.s32.totalorder %s117, %s131
      %p133 = scmp.eq.s32.totalorder %s23, 0
      %p134 = por %p132, %p133
      %s136 = sadd.s32 %s135, 1
      %p139 = scmp.eq.s32.totalorder %s17, 1
      %p140 = scmp.ne.s32.totalorder %s135, %s137
      %p141 = scmp.eq.s32.totalorder %s17, 0
      %p142 = por %p140, %p141
      %p143 = scmp.ne.s32.totalorder %s135, %s137
      %p144 = scmp.eq.s32.totalorder %s22, 1
      %p145 = por %p143, %p144
      %p146 = scmp.ne.s32.totalorder %s137, %s138
      %p147 = scmp.eq.s32.totalorder %s22, 0
      %p148 = por %p146, %p147
      %p149 = scmp.ne.s32.totalorder %s137, %s138
      %p150 = scmp.eq.s32.totalorder %s23, 1
      %p151 = por %p149, %p150
      %p153 = scmp.ne.s32.totalorder %s138, %s152
      %p154 = scmp.eq.s32.totalorder %s23, 0
      %p155 = por %p153, %p154
      %s156 = ssub.s32 %s17, %s24
      %p157 = scmp.eq.s32.totalorder %s156, 0
      %s159 = sadd.s32 %s158, 1
      %s160 = scalar_select %p157, %s158, %s159
      %p163 = pneg %p157
      %p164 = scmp.eq.s32.totalorder %s17, 1
      %p165 = por %p163, %p164
      %p166 = scmp.ne.s32.totalorder %s158, %s161
      %p167 = scmp.eq.s32.totalorder %s17, 0
      %p168 = por %p166, %p167
      %p169 = scmp.ne.s32.totalorder %s158, %s161
      %p170 = scmp.eq.s32.totalorder %s22, 1
      %p171 = por %p169, %p170
      %p172 = scmp.ne.s32.totalorder %s161, %s162
      %p173 = scmp.eq.s32.totalorder %s22, 0
      %p174 = por %p172, %p173
      %p175 = scmp.ne.s32.totalorder %s161, %s162
      %p176 = scmp.eq.s32.totalorder %s23, 1
      %p177 = por %p175, %p176
      %p179 = scmp.ne.s32.totalorder %s162, %s178
      %p180 = scmp.eq.s32.totalorder %s23, 0
      %p181 = por %p179, %p180
      %p182 = scmp.le.s32.totalorder 1, %s17
      %p183 = scmp.lt.s32.totalorder %s17, 3
      %p184 = pnand %p182, %p183
      %p185 = pneg %p184
      // Predicated region
      $region9: #{tpu_custom_call.1} parent=5 // pred_check
        _
      $region10: #{tpu_custom_call.1} parent=5 // pred_check_branch
        %187 = sbr.rel (%p184) target = $region12
      $region11: #{tpu_custom_call.1} parent=5 // pred_region
        %s188 = ssub.s32 %s17, 1
        // Predicated region
        $region13: #{tpu_custom_call.1} parent=11 // pred_check
          %p189 = pneg %p64
        $region14: #{tpu_custom_call.1} parent=11 // pred_check_branch
          %191 = sbr.rel (%p189) target = $region16
        $region15: #{tpu_custom_call.1} parent=11 // pred_region
          %s193 = ssub.s32 256, 256
          %194 = vsyncadd [#allocation3], %s193
          %s195 = sshll.u32 [#allocation2], 4
          %s196 = int_to_ptr.vmem [resolvable:$true] %s195
          %201 = dma.hbm_to_vmem [thread:$0]  %s1, 256, %s196, [#allocation3], 64, 64, 4
        $region16: #{tpu_custom_call.1} parent=11 // pred_fallthru
          _
        // Predicated region
        $region17: #{tpu_custom_call.1} parent=11 // pred_check
          %p202 = pneg %p85
        $region18: #{tpu_custom_call.1} parent=11 // pred_check_branch
          %204 = sbr.rel (%p202) target = $region20
        $region19: #{tpu_custom_call.1} parent=11 // pred_region
          %s206 = ssub.s32 256, 256
          %207 = vsyncadd [#allocation6], %s206
          %s208 = sshll.u32 [#allocation5], 4
          %s209 = int_to_ptr.vmem [resolvable:$true] %s208
          %214 = dma.hbm_to_vmem [thread:$0]  %s2, 256, %s209, [#allocation6], 64, 64, 4
        $region20: #{tpu_custom_call.1} parent=11 // pred_fallthru
          _
        // Predicated region
        $region21: #{tpu_custom_call.1} parent=11 // pred_check
          %p215 = pneg %p106
        $region22: #{tpu_custom_call.1} parent=11 // pred_check_branch
          %217 = sbr.rel (%p215) target = $region24
        $region23: #{tpu_custom_call.1} parent=11 // pred_region
          _
        $region24: #{tpu_custom_call.1} parent=11 // pred_fallthru
          _
        // Predicated region
        $region25: #{tpu_custom_call.1} parent=11 // pred_check
          %p218 = pneg %p127
        $region26: #{tpu_custom_call.1} parent=11 // pred_check_branch
          %220 = sbr.rel (%p218) target = $region28
        $region27: #{tpu_custom_call.1} parent=11 // pred_region
          _
        $region28: #{tpu_custom_call.1} parent=11 // pred_fallthru
          _
        // Predicated region
        $region29: #{tpu_custom_call.1} parent=11 // pred_check
          %p221 = pneg %p148
        $region30: #{tpu_custom_call.1} parent=11 // pred_check_branch
          %223 = sbr.rel (%p221) target = $region32
        $region31: #{tpu_custom_call.1} parent=11 // pred_region
          _
        $region32: #{tpu_custom_call.1} parent=11 // pred_fallthru
          _
      $region12: #{tpu_custom_call.1} parent=5 // pred_fallthru
        _
      %p224 = scmp.lt.s32.totalorder %s17, 2
      // Predicated region
      $region33: #{tpu_custom_call.1} parent=5 // pred_check
        %p225 = pneg %p224
      $region34: #{tpu_custom_call.1} parent=5 // pred_check_branch
        %227 = sbr.rel (%p225) target = $region36
      $region35: #{tpu_custom_call.1} parent=5 // pred_region
        // Predicated region
        $region37: #{tpu_custom_call.1} parent=35 // pred_check
          %p228 = pneg %p37
        $region38: #{tpu_custom_call.1} parent=35 // pred_check_branch
          %230 = sbr.rel (%p228) target = $region40
        $region39: #{tpu_custom_call.1} parent=35 // pred_region
          %p231 = scmp.lt.s32.totalorder %s17, 1
          %s232 = scalar_select %p231, %s17, 1
          %s233 = smul.addr %s232, 8
          %s234 = scalar_lea.vmem %s0, %s233
        $region40: #{tpu_custom_call.1} parent=35 // pred_fallthru
          _
      $region36: #{tpu_custom_call.1} parent=5 // pred_fallthru
        _
      %p235 = scmp.le.s32.totalorder 1, %s17
      %p236 = scmp.lt.s32.totalorder %s17, 3
      %p237 = pnand %p235, %p236
      %p238 = pneg %p237
      // Predicated region
      $region41: #{tpu_custom_call.1} parent=5 // pred_check
        _
      $region42: #{tpu_custom_call.1} parent=5 // pred_check_branch
        %240 = sbr.rel (%p237) target = $region44
      $region43: #{tpu_custom_call.1} parent=5 // pred_region
        %s241 = ssub.s32 %s17, 1
        // Predicated region
        $region45: #{tpu_custom_call.1} parent=43 // pred_check
          %p242 = pneg %p64
        $region46: #{tpu_custom_call.1} parent=43 // pred_check_branch
          %244 = sbr.rel (%p242) target = $region48
        $region47: #{tpu_custom_call.1} parent=43 // pred_region
          %245 = dma.done [#allocation3], 256
        $region48: #{tpu_custom_call.1} parent=43 // pred_fallthru
          _
        // Predicated region
        $region49: #{tpu_custom_call.1} parent=43 // pred_check
          %p246 = pneg %p85
        $region50: #{tpu_custom_call.1} parent=43 // pred_check_branch
          %248 = sbr.rel (%p246) target = $region52
        $region51: #{tpu_custom_call.1} parent=43 // pred_region
          %249 = dma.done [#allocation6], 256
        $region52: #{tpu_custom_call.1} parent=43 // pred_fallthru
          _
        %p250 = scmp.lt.s32.totalorder %s22, 1
        %s251 = scalar_select %p250, %s22, 1
        %s252 = smul.addr %s251, 8
        %s253 = scalar_lea.vmem %s0, %s252
        %p254 = pneg %p43
        %p255 = pneg %p40
        %p256 = pneg %p64
        %p257 = pneg %p61
        %p258 = pneg %p85
        %p259 = pneg %p82
        %p260 = pneg %p106
        %p261 = pneg %p103
        %p262 = pneg %p127
        %p263 = pneg %p124
        %p264 = pneg %p148
        %p265 = pneg %p145
        %p266 = pneg %p174
        %p267 = pneg %p171
        %s268 = sand.u32 %s161, 1
        %s269 = scalar_lea.sflag [#allocation4], %s268
        %s270 = sand.u32 %s161, 1
        %s271 = smul.addr %s270, 8
        %s272 = scalar_lea.vmem [#allocation7], %s271
        %p273 = scmp.lt.s32.totalorder %s22, 1
        %s274 = scalar_select %p273, %s22, 1
        %s275 = smul.addr %s274, 8
        %s276 = scalar_lea.vmem %s0, %s275
        %v278 = vld [vmem:[%s276] sm:$0xff]
        %v279 = vld [vmem:[%s5] sm:$0xff]
        %v280 = vpack.c.bf16 %v278, %v278
        %v281 = vld [vmem:[#allocation2] sm:$0xf]
        %v282 = vld [vmem:[#allocation2 + $0x4] sm:$0xf]
        %v283 = vld [vmem:[#allocation2 + $0x8] sm:$0xf]
        %v284 = vld [vmem:[#allocation2 + $0xc] sm:$0xf]
        %v285 = vlaneseq
        %v286 = vshrl.u32 %v285, 7
        %v287 = vsub.s32 0, %v286
        %v288 = vrot.slane %v279, %v287
        %v293 = vunpack.c.l.b16 %v281
        %v294 = vunpack.c.l.b16 %v282
        %v295 = vunpack.c.l.b16 %v283
        %v296 = vunpack.c.l.b16 %v284
        %v297 = vpack.c.b16 %v294, %v293
        %v298 = vpack.c.b16 %v296, %v295
        %vm301 = vcmask 261120
        %v303 = vsel %vm301, %v280, 0
        %305 = vmatprep.subr.bf16.mxu0 0
        %306 = vmatpush1.bf16.msra.mxu0 %v297
        %307 = vmatprep.subr.bf16.mxu0 0
        %308 = vmatpush1.bf16.msra.mxu0 %v298
        %309 = vmatprep.subr.bf16.mxu0 0
        %310 = vmatpush1.bf16.msra.mxu0 0
        %311 = vmatprep.subr.bf16.mxu0 0
        %312 = vmatpush1.bf16.msra.mxu0 0
        %313 = vmatprep.subr.bf16.mxu0 0
        %314 = vmatpush1.bf16.msra.mxu0 0
        %315 = vmatprep.subr.bf16.mxu0 0
        %316 = vmatpush1.bf16.msra.mxu0 0
        %317 = vmatprep.subr.bf16.mxu0 0
        %318 = vmatpush1.bf16.msra.mxu0 0
        %319 = vmatprep.subr.bf16.mxu0 0
        %320 = vmatpush1.bf16.msra.mxu0 0
        %321 = vmatprep.subr.bf16.mxu0 0
        %322 = vmatpush1.bf16.msra.mxu0 0
        %323 = vmatprep.subr.bf16.mxu0 0
        %324 = vmatpush1.bf16.msra.mxu0 0
        %325 = vmatprep.subr.bf16.mxu0 0
        %326 = vmatpush1.bf16.msra.mxu0 0
        %327 = vmatprep.subr.bf16.mxu0 0
        %328 = vmatpush1.bf16.msra.mxu0 0
        %329 = vmatprep.subr.bf16.mxu0 0
        %330 = vmatpush1.bf16.msra.mxu0 0
        %331 = vmatprep.subr.bf16.mxu0 0
        %332 = vmatpush1.bf16.msra.mxu0 0
        %333 = vmatprep.subr.bf16.mxu0 0
        %334 = vmatpush1.bf16.msra.mxu0 0
        %335 = vmatprep.subr.bf16.mxu0 0
        %336 = vmatpush1.bf16.msra.mxu0 0
        %337 = vmatprep.mubr.bf16.mxu0 0
        %338 = vmatmul.mubr.bf16.gmra.mrb[0].mxu0 %v303
        %v339 = vpop.f32.mrb[0].mxu0
        %v340 = vadd.f32 %v288, %v339
        %v341 = vpop.f32.mrb[0].mxu0
        %v342 = vpop.f32.mrb[0].mxu0
        %v343 = vpop.f32.mrb[0].mxu0
        %344 = vdwg.mxu0
        %v345 = vpack.c.bf16 %v340, %v340
        %347 = vrot.lane.b32.xlu0 %v345, 96
        %v348 = vpop.permute.xlu0 %347
        %vm349 = vcmask 130048
        %v351 = vsel %vm349, %v345, 0
        %v354 = vsel %vm349, %v348, 0
        %356 = vmatprep.subr.bf16.mxu0 0
        %357 = vmatpush1.bf16.xpose.msra.mxu0 %v354
        %358 = vmatprep.subr.bf16.mxu0 0
        %359 = vmatpush1.bf16.xpose.msra.mxu0 0
        %360 = vmatprep.subr.bf16.mxu0 0
        %361 = vmatpush1.bf16.xpose.msra.mxu0 0
        %362 = vmatprep.subr.bf16.mxu0 0
        %363 = vmatpush1.bf16.xpose.msra.mxu0 0
        %364 = vmatprep.subr.bf16.mxu0 0
        %365 = vmatpush1.bf16.xpose.msra.mxu0 0
        %366 = vmatprep.subr.bf16.mxu0 0
        %367 = vmatpush1.bf16.xpose.msra.mxu0 0
        %368 = vmatprep.subr.bf16.mxu0 0
        %369 = vmatpush1.bf16.xpose.msra.mxu0 0
        %370 = vmatprep.subr.bf16.mxu0 0
        %371 = vmatpush1.bf16.xpose.msra.mxu0 0
        %372 = vmatprep.subr.bf16.mxu0 0
        %373 = vmatpush1.bf16.xpose.msra.mxu0 0
        %374 = vmatprep.subr.bf16.mxu0 0
        %375 = vmatpush1.bf16.xpose.msra.mxu0 0
        %376 = vmatprep.subr.bf16.mxu0 0
        %377 = vmatpush1.bf16.xpose.msra.mxu0 0
        %378 = vmatprep.subr.bf16.mxu0 0
        %379 = vmatpush1.bf16.xpose.msra.mxu0 0
        %380 = vmatprep.subr.bf16.mxu0 0
        %381 = vmatpush1.bf16.xpose.msra.mxu0 0
        %382 = vmatprep.subr.bf16.mxu0 0
        %383 = vmatpush1.bf16.xpose.msra.mxu0 0
        %384 = vmatprep.subr.bf16.mxu0 0
        %385 = vmatpush1.bf16.xpose.msra.mxu0 0
        %386 = vmatprep.subr.bf16.mxu0 0
        %387 = vmatpush1.bf16.xpose.msra.mxu0 0
        %388 = vmatprep.mubr.bf16.mxu0 0
        %389 = vmatmul.mubr.bf16.gmra.mrb[0].mxu0 %v351
        %v390 = vpop.f32.mrb[0].mxu0
        %v391 = vadd.f32 0.0, %v390
        %v392 = vpop.f32.mrb[0].mxu0
        %v393 = vpop.f32.mrb[0].mxu0
        %v394 = vpop.f32.mrb[0].mxu0
        %395 = vdwg.mxu0
        %vm396 = vcmask 64512
        %v397 = vsel %vm396, %v391, -inf
        %398 = vmax.xlane.f32.xlu0 %v397
        %v399 = vpop.xlane.xlu0 %398
        %v400 = vsub.f32 %v391, %v399
        %v401 = vmul.f32 %v400, 1.442695
        %v402 = vpow.pop %v401
        %v403 = vsel %vm396, %v402, 0.0
        %404 = vadd.xlane.f32.xlu0 %v403
        %v405 = vpop.xlane.xlu0 %404
        %v406 = vrcp.pop %v405
        %v407 = vmul.f32 %v402, %v406
        %v408 = vpack.c.bf16 %v407, %v407
        %409 = vrot.lane.b32.xlu0 %v345, 64
        %v410 = vpop.permute.xlu0 %409
        %v412 = vsel %vm396, %v408, 0
        %vm414 = vcmask 1043456
        %v416 = vsel %vm414, %v410, 0
        %418 = vmatprep.subr.bf16.mxu0 0
        %419 = vmatpush1.bf16.msra.mxu0 %v416
        %420 = vmatprep.subr.bf16.mxu0 0
        %421 = vmatpush1.bf16.msra.mxu0 0
        %422 = vmatprep.subr.bf16.mxu0 0
        %423 = vmatpush1.bf16.msra.mxu0 0
        %424 = vmatprep.subr.bf16.mxu0 0
        %425 = vmatpush1.bf16.msra.mxu0 0
        %426 = vmatprep.subr.bf16.mxu0 0
        %427 = vmatpush1.bf16.msra.mxu0 0
        %428 = vmatprep.subr.bf16.mxu0 0
        %429 = vmatpush1.bf16.msra.mxu0 0
        %430 = vmatprep.subr.bf16.mxu0 0
        %431 = vmatpush1.bf16.msra.mxu0 0
        %432 = vmatprep.subr.bf16.mxu0 0
        %433 = vmatpush1.bf16.msra.mxu0 0
        %434 = vmatprep.subr.bf16.mxu0 0
        %435 = vmatpush1.bf16.msra.mxu0 0
        %436 = vmatprep.subr.bf16.mxu0 0
        %437 = vmatpush1.bf16.msra.mxu0 0
        %438 = vmatprep.subr.bf16.mxu0 0
        %439 = vmatpush1.bf16.msra.mxu0 0
        %440 = vmatprep.subr.bf16.mxu0 0
        %441 = vmatpush1.bf16.msra.mxu0 0
        %442 = vmatprep.subr.bf16.mxu0 0
        %443 = vmatpush1.bf16.msra.mxu0 0
        %444 = vmatprep.subr.bf16.mxu0 0
        %445 = vmatpush1.bf16.msra.mxu0 0
        %446 = vmatprep.subr.bf16.mxu0 0
        %447 = vmatpush1.bf16.msra.mxu0 0
        %448 = vmatprep.subr.bf16.mxu0 0
        %449 = vmatpush1.bf16.msra.mxu0 0
        %450 = vmatprep.mubr.bf16.mxu0 0
        %451 = vmatmul.mubr.bf16.gmra.mrb[0].mxu0 %v412
        %v452 = vpop.f32.mrb[0].mxu0
        %v453 = vadd.f32 0.0, %v452
        %v454 = vpop.f32.mrb[0].mxu0
        %v455 = vpop.f32.mrb[0].mxu0
        %v456 = vpop.f32.mrb[0].mxu0
        %457 = vdwg.mxu0
        %458 = vrot.lane.b32.xlu0 %v345, 112
        %v459 = vpop.permute.xlu0 %458
        %460 = vrot.lane.b32.xlu0 %v345, 80
        %v461 = vpop.permute.xlu0 %460
        %v463 = vsel %vm349, %v459, 0
        %v466 = vsel %vm349, %v461, 0
        %468 = vmatprep.subr.bf16.mxu0 0
        %469 = vmatpush1.bf16.xpose.msra.mxu0 %v466
        %470 = vmatprep.subr.bf16.mxu0 0
        %471 = vmatpush1.bf16.xpose.msra.mxu0 0
        %472 = vmatprep.subr.bf16.mxu0 0
        %473 = vmatpush1.bf16.xpose.msra.mxu0 0
        %474 = vmatprep.subr.bf16.mxu0 0
        %475 = vmatpush1.bf16.xpose.msra.mxu0 0
        %476 = vmatprep.subr.bf16.mxu0 0
        %477 = vmatpush1.bf16.xpose.msra.mxu0 0
        %478 = vmatprep.subr.bf16.mxu0 0
        %479 = vmatpush1.bf16.xpose.msra.mxu0 0
        %480 = vmatprep.subr.bf16.mxu0 0
        %481 = vmatpush1.bf16.xpose.msra.mxu0 0
        %482 = vmatprep.subr.bf16.mxu0 0
        %483 = vmatpush1.bf16.xpose.msra.mxu0 0
        %484 = vmatprep.subr.bf16.mxu0 0
        %485 = vmatpush1.bf16.xpose.msra.mxu0 0
        %486 = vmatprep.subr.bf16.mxu0 0
        %487 = vmatpush1.bf16.xpose.msra.mxu0 0
        %488 = vmatprep.subr.bf16.mxu0 0
        %489 = vmatpush1.bf16.xpose.msra.mxu0 0
        %490 = vmatprep.subr.bf16.mxu0 0
        %491 = vmatpush1.bf16.xpose.msra.mxu0 0
        %492 = vmatprep.subr.bf16.mxu0 0
        %493 = vmatpush1.bf16.xpose.msra.mxu0 0
        %494 = vmatprep.subr.bf16.mxu0 0
        %495 = vmatpush1.bf16.xpose.msra.mxu0 0
        %496 = vmatprep.subr.bf16.mxu0 0
        %497 = vmatpush1.bf16.xpose.msra.mxu0 0
        %498 = vmatprep.subr.bf16.mxu0 0
        %499 = vmatpush1.bf16.xpose.msra.mxu0 0
        %500 = vmatprep.mubr.bf16.mxu0 0
        %501 = vmatmul.mubr.bf16.gmra.mrb[0].mxu0 %v463
        %v502 = vpop.f32.mrb[0].mxu0
        %v503 = vadd.f32 0.0, %v502
        %v504 = vpop.f32.mrb[0].mxu0
        %v505 = vpop.f32.mrb[0].mxu0
        %v506 = vpop.f32.mrb[0].mxu0
        %507 = vdwg.mxu0
        %v508 = vsel %vm396, %v503, -inf
        %509 = vmax.xlane.f32.xlu0 %v508
        %v510 = vpop.xlane.xlu0 %509
        %v511 = vsub.f32 %v503, %v510
        %v512 = vmul.f32 %v511, 1.442695
        %v513 = vpow.pop %v512
        %v514 = vsel %vm396, %v513, 0.0
        %515 = vadd.xlane.f32.xlu0 %v514
        %v516 = vpop.xlane.xlu0 %515
        %v517 = vrcp.pop %v516
        %v518 = vmul.f32 %v513, %v517
        %v519 = vpack.c.bf16 %v518, %v518
        %520 = vrot.lane.b32.xlu0 %v345, 48
        %v521 = vpop.permute.xlu0 %520
        %v523 = vsel %vm396, %v519, 0
        %v526 = vsel %vm414, %v521, 0
        %528 = vmatprep.subr.bf16.mxu0 0
        %529 = vmatpush1.bf16.msra.mxu0 %v526
        %530 = vmatprep.subr.bf16.mxu0 0
        %531 = vmatpush1.bf16.msra.mxu0 0
        %532 = vmatprep.subr.bf16.mxu0 0
        %533 = vmatpush1.bf16.msra.mxu0 0
        %534 = vmatprep.subr.bf16.mxu0 0
        %535 = vmatpush1.bf16.msra.mxu0 0
        %536 = vmatprep.subr.bf16.mxu0 0
        %537 = vmatpush1.bf16.msra.mxu0 0
        %538 = vmatprep.subr.bf16.mxu0 0
        %539 = vmatpush1.bf16.msra.mxu0 0
        %540 = vmatprep.subr.bf16.mxu0 0
        %541 = vmatpush1.bf16.msra.mxu0 0
        %542 = vmatprep.subr.bf16.mxu0 0
        %543 = vmatpush1.bf16.msra.mxu0 0
        %544 = vmatprep.subr.bf16.mxu0 0
        %545 = vmatpush1.bf16.msra.mxu0 0
        %546 = vmatprep.subr.bf16.mxu0 0
        %547 = vmatpush1.bf16.msra.mxu0 0
        %548 = vmatprep.subr.bf16.mxu0 0
        %549 = vmatpush1.bf16.msra.mxu0 0
        %550 = vmatprep.subr.bf16.mxu0 0
        %551 = vmatpush1.bf16.msra.mxu0 0
        %552 = vmatprep.subr.bf16.mxu0 0
        %553 = vmatpush1.bf16.msra.mxu0 0
        %554 = vmatprep.subr.bf16.mxu0 0
        %555 = vmatpush1.bf16.msra.mxu0 0
        %556 = vmatprep.subr.bf16.mxu0 0
        %557 = vmatpush1.bf16.msra.mxu0 0
        %558 = vmatprep.subr.bf16.mxu0 0
        %559 = vmatpush1.bf16.msra.mxu0 0
        %560 = vmatprep.mubr.bf16.mxu0 0
        %561 = vmatmul.mubr.bf16.gmra.mrb[0].mxu0 %v523
        %v562 = vpop.f32.mrb[0].mxu0
        %v563 = vadd.f32 0.0, %v562
        %v564 = vpop.f32.mrb[0].mxu0
        %v565 = vpop.f32.mrb[0].mxu0
        %v566 = vpop.f32.mrb[0].mxu0
        %567 = vdwg.mxu0
        %569 = vrot.lane.b32.xlu0 %v563, 16
        %v570 = vpop.permute.xlu0 %569
        %v572 = vsel %vm349, %v453, %v570
        %v573 = vpack.c.bf16 %v572, %v572
        %v574 = vld [vmem:[#allocation5] sm:$0xf]
        %v575 = vld [vmem:[#allocation5 + $0x4] sm:$0xf]
        %v576 = vld [vmem:[#allocation5 + $0x8] sm:$0xf]
        %v577 = vld [vmem:[#allocation5 + $0xc] sm:$0xf]
        %v578 = vlaneseq
        %v579 = vshrl.u32 %v578, 7
        %v580 = vsub.s32 1, %v579
        %v581 = vrot.slane %v279, %v580
        %v586 = vunpack.c.l.b16 %v574
        %v587 = vunpack.c.l.b16 %v575
        %v588 = vunpack.c.l.b16 %v576
        %v589 = vunpack.c.l.b16 %v577
        %v590 = vpack.c.b16 %v587, %v586
        %v591 = vpack.c.b16 %v589, %v588
        %v595 = vsel %vm301, %v573, 0
        %597 = vmatprep.subr.bf16.mxu0 0
        %598 = vmatpush1.bf16.msra.mxu0 %v590
        %599 = vmatprep.subr.bf16.mxu0 0
        %600 = vmatpush1.bf16.msra.mxu0 %v591
        %601 = vmatprep.subr.bf16.mxu0 0
        %602 = vmatpush1.bf16.msra.mxu0 0
        %603 = vmatprep.subr.bf16.mxu0 0
        %604 = vmatpush1.bf16.msra.mxu0 0
        %605 = vmatprep.subr.bf16.mxu0 0
        %606 = vmatpush1.bf16.msra.mxu0 0
        %607 = vmatprep.subr.bf16.mxu0 0
        %608 = vmatpush1.bf16.msra.mxu0 0
        %609 = vmatprep.subr.bf16.mxu0 0
        %610 = vmatpush1.bf16.msra.mxu0 0
        %611 = vmatprep.subr.bf16.mxu0 0
        %612 = vmatpush1.bf16.msra.mxu0 0
        %613 = vmatprep.subr.bf16.mxu0 0
        %614 = vmatpush1.bf16.msra.mxu0 0
        %615 = vmatprep.subr.bf16.mxu0 0
        %616 = vmatpush1.bf16.msra.mxu0 0
        %617 = vmatprep.subr.bf16.mxu0 0
        %618 = vmatpush1.bf16.msra.mxu0 0
        %619 = vmatprep.subr.bf16.mxu0 0
        %620 = vmatpush1.bf16.msra.mxu0 0
        %621 = vmatprep.subr.bf16.mxu0 0
        %622 = vmatpush1.bf16.msra.mxu0 0
        %623 = vmatprep.subr.bf16.mxu0 0
        %624 = vmatpush1.bf16.msra.mxu0 0
        %625 = vmatprep.subr.bf16.mxu0 0
        %626 = vmatpush1.bf16.msra.mxu0 0
        %627 = vmatprep.subr.bf16.mxu0 0
        %628 = vmatpush1.bf16.msra.mxu0 0
        %629 = vmatprep.mubr.bf16.mxu0 0
        %630 = vmatmul.mubr.bf16.gmra.mrb[0].mxu0 %v595
        %v631 = vpop.f32.mrb[0].mxu0
        %v632 = vadd.f32 %v581, %v631
        %v633 = vpop.f32.mrb[0].mxu0
        %v634 = vpop.f32.mrb[0].mxu0
        %v635 = vpop.f32.mrb[0].mxu0
        %636 = vdwg.mxu0
        %v637 = vadd.f32 %v278, %v632
        %v638 = vsel %vm301, %v637, 0.0
        %639 = vadd.xlane.f32.xlu0 %v638
        %v640 = vpop.xlane.xlu0 %639
        %v641 = vrcp.pop 32.0
        %v642 = vmul.f32 %v640, %v641
        %v643 = vsub.f32 %v637, %v642
        %v644 = vmul.f32 %v643, %v643
        %v645 = vsel %vm301, %v644, 0.0
        %646 = vadd.xlane.f32.xlu0 %v645
        %v647 = vpop.xlane.xlu0 %646
        %v648 = vmul.f32 %v647, %v641
        %v649 = vadd.f32 %v648, 1e-05
        %v650 = vrsqrt.pop %v649
        %v651 = vmul.f32 %v643, %v650
        %v652 = vlaneseq
        %v653 = vshrl.u32 %v652, 7
        %v654 = vsub.s32 4, %v653
        %v655 = vrot.slane %v279, %v654
        %v656 = vmul.f32 %v651, %v655
        %v657 = vlaneseq
        %v658 = vshrl.u32 %v657, 7
        %v659 = vsub.s32 5, %v658
        %v660 = vrot.slane %v279, %v659
        %v661 = vadd.f32 %v656, %v660
        %v662 = vpack.c.bf16 %v661, %v661
        %v663 = vld [vmem:[%s3] sm:$0xf]
        %v664 = vld [vmem:[%s3 + $0x4] sm:$0xf]
        %v665 = vld [vmem:[%s3 + $0x8] sm:$0xf]
        %v666 = vld [vmem:[%s3 + $0xc] sm:$0xf]
        %v667 = vlaneseq
        %v668 = vshrl.u32 %v667, 7
        %v669 = vsub.s32 2, %v668
        %v670 = vrot.slane %v279, %v669
        %v675 = vunpack.c.l.b16 %v663
        %v676 = vunpack.c.l.b16 %v664
        %v677 = vunpack.c.l.b16 %v665
        %v678 = vunpack.c.l.b16 %v666
        %v679 = vpack.c.b16 %v676, %v675
        %v680 = vpack.c.b16 %v678, %v677
        %v684 = vsel %vm301, %v662, 0
        %686 = vmatprep.subr.bf16.mxu0 0
        %687 = vmatpush1.bf16.msra.mxu0 %v679
        %688 = vmatprep.subr.bf16.mxu0 0
        %689 = vmatpush1.bf16.msra.mxu0 %v680
        %690 = vmatprep.subr.bf16.mxu0 0
        %691 = vmatpush1.bf16.msra.mxu0 0
        %692 = vmatprep.subr.bf16.mxu0 0
        %693 = vmatpush1.bf16.msra.mxu0 0
        %694 = vmatprep.subr.bf16.mxu0 0
        %695 = vmatpush1.bf16.msra.mxu0 0
        %696 = vmatprep.subr.bf16.mxu0 0
        %697 = vmatpush1.bf16.msra.mxu0 0
        %698 = vmatprep.subr.bf16.mxu0 0
        %699 = vmatpush1.bf16.msra.mxu0 0
        %700 = vmatprep.subr.bf16.mxu0 0
        %701 = vmatpush1.bf16.msra.mxu0 0
        %702 = vmatprep.subr.bf16.mxu0 0
        %703 = vmatpush1.bf16.msra.mxu0 0
        %704 = vmatprep.subr.bf16.mxu0 0
        %705 = vmatpush1.bf16.msra.mxu0 0
        %706 = vmatprep.subr.bf16.mxu0 0
        %707 = vmatpush1.bf16.msra.mxu0 0
        %708 = vmatprep.subr.bf16.mxu0 0
        %709 = vmatpush1.bf16.msra.mxu0 0
        %710 = vmatprep.subr.bf16.mxu0 0
        %711 = vmatpush1.bf16.msra.mxu0 0
        %712 = vmatprep.subr.bf16.mxu0 0
        %713 = vmatpush1.bf16.msra.mxu0 0
        %714 = vmatprep.subr.bf16.mxu0 0
        %715 = vmatpush1.bf16.msra.mxu0 0
        %716 = vmatprep.subr.bf16.mxu0 0
        %717 = vmatpush1.bf16.msra.mxu0 0
        %718 = vmatprep.mubr.bf16.mxu0 0
        %719 = vmatmul.mubr.bf16.gmra.mrb[0].mxu0 %v684
        %v720 = vpop.f32.mrb[0].mxu0
        %v721 = vadd.f32 %v670, %v720
        %v722 = vpop.f32.mrb[0].mxu0
        %v723 = vpop.f32.mrb[0].mxu0
        %v724 = vpop.f32.mrb[0].mxu0
        %725 = vdwg.mxu0
        %v726 = vmax.f32 %v721, 0.0
        %v727 = vpack.c.bf16 %v726, %v726
        %v728 = vld [vmem:[%s4] sm:$0xf]
        %v729 = vld [vmem:[%s4 + $0x4] sm:$0xf]
        %v730 = vlaneseq
        %v731 = vshrl.u32 %v730, 7
        %v732 = vsub.s32 3, %v731
        %v733 = vrot.slane %v279, %v732
        %v736 = vunpack.c.l.b16 %v728
        %v737 = vunpack.c.l.b16 %v729
        %v738 = vpack.c.b16 %v737, %v736
        %v741 = vsel %vm349, %v727, 0
        %743 = vmatprep.subr.bf16.mxu0 0
        %744 = vmatpush1.bf16.msra.mxu0 %v738
        %745 = vmatprep.subr.bf16.mxu0 0
        %746 = vmatpush1.bf16.msra.mxu0 0
        %747 = vmatprep.subr.bf16.mxu0 0
        %748 = vmatpush1.bf16.msra.mxu0 0
        %749 = vmatprep.subr.bf16.mxu0 0
        %750 = vmatpush1.bf16.msra.mxu0 0
        %751 = vmatprep.subr.bf16.mxu0 0
        %752 = vmatpush1.bf16.msra.mxu0 0
        %753 = vmatprep.subr.bf16.mxu0 0
        %754 = vmatpush1.bf16.msra.mxu0 0
        %755 = vmatprep.subr.bf16.mxu0 0
        %756 = vmatpush1.bf16.msra.mxu0 0
        %757 = vmatprep.subr.bf16.mxu0 0
        %758 = vmatpush1.bf16.msra.mxu0 0
        %759 = vmatprep.subr.bf16.mxu0 0
        %760 = vmatpush1.bf16.msra.mxu0 0
        %761 = vmatprep.subr.bf16.mxu0 0
        %762 = vmatpush1.bf16.msra.mxu0 0
        %763 = vmatprep.subr.bf16.mxu0 0
        %764 = vmatpush1.bf16.msra.mxu0 0
        %765 = vmatprep.subr.bf16.mxu0 0
        %766 = vmatpush1.bf16.msra.mxu0 0
        %767 = vmatprep.subr.bf16.mxu0 0
        %768 = vmatpush1.bf16.msra.mxu0 0
        %769 = vmatprep.subr.bf16.mxu0 0
        %770 = vmatpush1.bf16.msra.mxu0 0
        %771 = vmatprep.subr.bf16.mxu0 0
        %772 = vmatpush1.bf16.msra.mxu0 0
        %773 = vmatprep.subr.bf16.mxu0 0
        %774 = vmatpush1.bf16.msra.mxu0 0
        %775 = vmatprep.mubr.bf16.mxu0 0
        %776 = vmatmul.mubr.bf16.gmra.mrb[0].mxu0 %v741
        %v777 = vpop.f32.mrb[0].mxu0
        %v778 = vadd.f32 %v733, %v777
        %v779 = vpop.f32.mrb[0].mxu0
        %v780 = vpop.f32.mrb[0].mxu0
        %v781 = vpop.f32.mrb[0].mxu0
        %782 = vdwg.mxu0
        %v783 = vadd.f32 %v661, %v778
        %v784 = vsel %vm301, %v783, 0.0
        %785 = vadd.xlane.f32.xlu0 %v784
        %v786 = vpop.xlane.xlu0 %785
        %v787 = vmul.f32 %v786, %v641
        %v788 = vsub.f32 %v783, %v787
        %v789 = vmul.f32 %v788, %v788
        %v790 = vsel %vm301, %v789, 0.0
        %791 = vadd.xlane.f32.xlu0 %v790
        %v792 = vpop.xlane.xlu0 %791
        %v793 = vmul.f32 %v792, %v641
        %v794 = vadd.f32 %v793, 1e-05
        %v795 = vrsqrt.pop %v794
        %v796 = vmul.f32 %v788, %v795
        %v797 = vlaneseq
        %v798 = vshrl.u32 %v797, 7
        %v799 = vsub.s32 6, %v798
        %v800 = vrot.slane %v279, %v799
        %v801 = vmul.f32 %v796, %v800
        %v802 = vlaneseq
        %v803 = vshrl.u32 %v802, 7
        %v804 = vsub.s32 7, %v803
        %v805 = vrot.slane %v279, %v804
        %v806 = vadd.f32 %v801, %v805
        %807 = vst.msk [vmem:[%s272] sm:$0xff] %vm301, %v806
        %s808 = sand.u32 %s161, 1
        %s809 = scalar_lea.sflag [#allocation4], %s808
        %s810 = sand.u32 %s161, 1
        %s811 = smul.addr %s810, 8
        %s812 = scalar_lea.vmem [#allocation7], %s811
        // Predicated region
        $region53: #{tpu_custom_call.1} parent=43 // pred_check
          %p813 = pneg %p171
        $region54: #{tpu_custom_call.1} parent=43 // pred_check_branch
          %815 = sbr.rel (%p813) target = $region56
        $region55: #{tpu_custom_call.1} parent=43 // pred_region
          %s817 = ssub.s32 128, 128
          %818 = vsyncadd %s809, %s817
          %s819 = smul.addr %s22, 128
          %s820 = scalar_lea.hbm %s6, %s819
          %s822 = sshll.u32 %s812, 4
          %s823 = int_to_ptr.vmem [resolvable:$true] %s822
          %825 = dma.vmem_to_hbm [thread:$0]  %s823, 128, %s820, %s809
        $region56: #{tpu_custom_call.1} parent=43 // pred_fallthru
          _
      $region44: #{tpu_custom_call.1} parent=5 // pred_fallthru
        _
      %p826 = scmp.le.s32.totalorder 2, %s17
      // Predicated region
      $region57: #{tpu_custom_call.1} parent=5 // pred_check
        %p827 = pneg %p826
      $region58: #{tpu_custom_call.1} parent=5 // pred_check_branch
        %829 = sbr.rel (%p827) target = $region60
      $region59: #{tpu_custom_call.1} parent=5 // pred_region
        %s830 = ssub.s32 %s17, 2
        // Predicated region
        $region61: #{tpu_custom_call.1} parent=59 // pred_check
          %p831 = pneg %p177
        $region62: #{tpu_custom_call.1} parent=59 // pred_check_branch
          %833 = sbr.rel (%p831) target = $region64
        $region63: #{tpu_custom_call.1} parent=59 // pred_region
          %s834 = sand.u32 %s162, 1
          %s835 = scalar_lea.sflag [#allocation4], %s834
          %s836 = sand.u32 %s162, 1
          %s837 = smul.addr %s836, 8
          %s838 = scalar_lea.vmem [#allocation7], %s837
          %839 = dma.done %s835, 128
        $region64: #{tpu_custom_call.1} parent=59 // pred_fallthru
          _
      $region60: #{tpu_custom_call.1} parent=5 // pred_fallthru
        _
    $region6: #{tpu_custom_call.1} parent=1 // loop_footer
      %s21 = sadd.s32 1, %s17
    $region7: #{tpu_custom_call.1} parent=1 // loop_footer_branch
      %16 = sbr.rel target = $region3
    $region8: #{tpu_custom_call.1} parent=1 // loop_exit
      _
    %840 = vsyncpa [#allocation3], 1
    %s841 = scalar_lea.sflag [#allocation3], 1
    %842 = vsyncpa %s841, 1
    %843 = vsyncpa [#allocation6], 1
    %844 = vsyncpa [#allocation4], 1
    %s845 = scalar_lea.sflag [#allocation4], 1
    %846 = vsyncpa %s845, 1

</llo_original>
